<compile_context>
chip_gen: v6e
topology: v6e:2x2x1
jax: 0.10.0
libtpu: 0.0.40
codegen_flags: <defaults>
</compile_context>

<pallas_src>
import functools
import math

import jax
import jax.numpy as jnp
from jax.experimental import pallas as pl
from jax.experimental.pallas import tpu as pltpu

# Problem sizes (small, MXU/vreg friendly).
VOCAB_SIZE = 128   # V
EMB_SIZE = 128     # E

TB_MAX = 512       # max tokens per grid step (amortizes per-step overhead)
SUB = 128          # in-kernel sub-tile rows (fills the MXU M-dim)


def _round_up(x: int, m: int) -> int:
    return ((x + m - 1) // m) * m


def _choose_block(n_tokens: int) -> tuple[int, int]:
    """Pick (tokens-per-block, n_blocks) with padding only to a multiple of 8."""
    n8 = _round_up(n_tokens, 8)
    if n8 <= TB_MAX:
        return n8, 1                         # single block, <=7 padded rows
    n_blocks = -(-n8 // TB_MAX)              # cdiv
    tb = _round_up(-(-n8 // n_blocks), 8)    # balanced blocks, each mult of 8
    return tb, n_blocks


def _sub_tiles(tb: int, sub: int) -> tuple[tuple[int, int], ...]:
    """Static (row_start, row_count) chunks of at most `sub` rows."""
    tiles, r = [], 0
    while r < tb:
        size = min(sub, tb - r)
        tiles.append((r, size))
        r += size
    return tuple(tiles)


def _token_embedding_kernel(tok_ref, emb_ref, out_ref, *, sub_tiles, vocab, scale):
    # tok_ref : VMEM int32[TB, 1]   token ids for this block
    # emb_ref : VMEM f32[V, E]      full embedding table (resident each step)
    # out_ref : VMEM f32[TB, E]     scaled embeddings for this block
    table = emb_ref[...]                       # hoisted: loaded once per step
    # Statically-unrolled sub-tile loop: each chunk's selector/result is dead
    # after its store, bounding live vregs (no (TB, V) selector materialized).
    for r0, rows in sub_tiles:
        toks = tok_ref[r0:r0 + rows, :]        # (rows, 1) int32
        col_ids = jax.lax.broadcasted_iota(jnp.int32, (rows, vocab), 1)
        # One-hot selector with the sqrt(E) scale folded in (exact in f32).
        # NOTE: if selector/table ever become bf16, use a 1.0 one-hot and apply
        # the scale as a post-matmul VPU multiply instead.
        sel = jnp.where(col_ids == toks, scale, 0.0).astype(table.dtype)
        out_ref[r0:r0 + rows, :] = jnp.dot(
            sel, table, preferred_element_type=jnp.float32
        ).astype(out_ref.dtype)


def token_embedding(tokens: jax.Array, emb_table: jax.Array) -> jax.Array:
    """tokens: int (B, S); emb_table: f32 (V, E)  ->  f32 (B, S, E)."""
    B, S = tokens.shape
    V, E = emb_table.shape

    tok_flat = tokens.reshape(-1).astype(jnp.int32)
    N = tok_flat.shape[0]

    TB, n_blocks = _choose_block(N)
    N_pad = TB * n_blocks
    if N_pad != N:
        tok_flat = jnp.pad(tok_flat, (0, N_pad - N))
    tok_2d = tok_flat.reshape(N_pad, 1)

    kernel = functools.partial(
        _token_embedding_kernel,
        sub_tiles=_sub_tiles(TB, SUB),
        vocab=V,
        scale=math.sqrt(E),
    )

    # Advisory cost: one-hot matmul flops; HBM traffic = tokens + table + output.
    cost = pl.CostEstimate(
        flops=2 * N_pad * V * E,
        transcendentals=0,
        bytes_accessed=N_pad * 4 + V * E * 4 + N_pad * E * 4,
    )

    out_flat = pl.pallas_call(
        kernel,
        out_shape=jax.ShapeDtypeStruct((N_pad, E), jnp.float32),
        grid_spec=pltpu.PrefetchScalarGridSpec(
            num_scalar_prefetch=0,
            grid=(n_blocks,),
            in_specs=[
                # Token ids for this block (VMEM vector input, not SMEM scalars).
                pl.BlockSpec((TB, 1), lambda i: (i, 0)),
                # Full table every step; constant block index -> no per-step
                # re-DMA, stays VMEM-resident (64 KiB; double-buffer negligible).
                pl.BlockSpec((V, E), lambda i: (0, 0)),
            ],
            out_specs=pl.BlockSpec((TB, E), lambda i: (i, 0)),
        ),
        compiler_params=pltpu.CompilerParams(
            # Independent output blocks. On v7x, switch to pltpu.CORE_PARALLEL
            # (or pl.core_map over create_tensorcore_mesh) to shard blocks
            # across both TensorCores; "parallel" is kept here as the safe,
            # codegen-neutral choice for v5e/v6e.
            dimension_semantics=("parallel",),
        ),
        cost_estimate=cost,
    )(tok_2d, emb_table)

    return out_flat[:N].reshape(B, S, E)


if __name__ == "__main__":
    key = jax.random.PRNGKey(0)
    k_emb, k_tok = jax.random.split(key)

    # Deterministic parameter init (nn.Embedding default is N(0, 1)).
    emb_table = jax.random.normal(k_emb, (VOCAB_SIZE, EMB_SIZE), dtype=jnp.float32)

    # Small token batch: batch=2, seq=8.
    tokens = jax.random.randint(k_tok, (2, 8), 0, VOCAB_SIZE, dtype=jnp.int32)

    out = jax.block_until_ready(token_embedding(tokens, emb_table))

    # Reference: plain-JAX embedding lookup * sqrt(E).
    ref = jnp.take(emb_table, tokens, axis=0) * math.sqrt(EMB_SIZE)
    assert out.shape == (2, 8, EMB_SIZE)
    assert jnp.allclose(out, ref, atol=1e-5, rtol=1e-5)

    # Also exercise a larger, multi-block shape (adaptive TB + sub-tiling path).
    tokens_big = jax.random.randint(
        jax.random.PRNGKey(1), (4, 300), 0, VOCAB_SIZE, dtype=jnp.int32
    )
    out_big = jax.block_until_ready(token_embedding(tokens_big, emb_table))
    ref_big = jnp.take(emb_table, tokens_big, axis=0) * math.sqrt(EMB_SIZE)
    assert jnp.allclose(out_big, ref_big, atol=1e-5, rtol=1e-5)

    print("KERNEL_OK")
</pallas_src>

<mosaic_0001>
module attributes {stable_mosaic.version = 11 : i64} {
  func.func @_token_embedding_kernel(%arg0: i32, %arg1: memref<16x1xi32, #tpu.memory_space<vmem>>, %arg2: memref<128x128xf32, #tpu.memory_space<vmem>>, %arg3: memref<16x128xf32, #tpu.memory_space<vmem>>) attributes {dimension_semantics = [#tpu.dimension_semantics<parallel>], iteration_bounds = array<i64: 1>, scalar_prefetch = 0 : i64, scratch_operands = 0 : i64, tpu.core_type = #tpu.core_type<tc>, window_params = [{transform_indices = @transform_0, window_bounds = array<i64: 16, 1>}, {pipeline_mode = #tpu.pipeline_mode<synchronous>, transform_indices = @transform_1, window_bounds = array<i64: 128, 128>}, {transform_indices = @transform_2, window_bounds = array<i64: 16, 128>}]} {
    %c0 = arith.constant 0 : index
    %c0_0 = arith.constant 0 : index
    %0 = vector.load %arg2[%c0, %c0_0] : memref<128x128xf32, #tpu.memory_space<vmem>>, vector<128x128xf32>
    %c0_1 = arith.constant 0 : index
    %c0_2 = arith.constant 0 : index
    %1 = vector.load %arg1[%c0_1, %c0_2] : memref<16x1xi32, #tpu.memory_space<vmem>>, vector<16x1xi32>
    %2 = tpu.iota {dimensions = array<i32: 1>} : vector<16x128xi32>
    %3 = vector.broadcast %1 : vector<16x1xi32> to vector<16x128xi32>
    %4 = arith.cmpi eq, %2, %3 : vector<16x128xi32>
    %cst = arith.constant 11.3137083 : f32
    %cst_3 = arith.constant 0.000000e+00 : f32
    %5 = vector.broadcast %cst : f32 to vector<16x128xf32>
    %6 = vector.broadcast %cst_3 : f32 to vector<16x128xf32>
    %7 = arith.select %4, %5, %6 : vector<16x128xi1>, vector<16x128xf32>
    %cst_4 = arith.constant dense<0.000000e+00> : vector<16x128xf32>
    %8 = tpu.matmul %7, %0, %cst_4 {dimension_numbers = #tpu.dot_dimension_numbers<[1], [0], [0], [1], [0, 0, 1, 1], [], []>} : vector<16x128xf32>, vector<128x128xf32>, vector<16x128xf32> -> vector<16x128xf32>
    %c0_5 = arith.constant 0 : index
    %c0_6 = arith.constant 0 : index
    %9 = vector.load %arg3[%c0_5, %c0_6] : memref<16x128xf32, #tpu.memory_space<vmem>>, vector<16x128xf32>
    tpu.vector_store %arg3[%c0_5, %c0_6], %8 {strides = array<i32>} : memref<16x128xf32, #tpu.memory_space<vmem>>, vector<16x128xf32>,
    return
  }
  func.func @transform_0(%arg0: i32) -> (i32, i32) {
    %c0_i32 = arith.constant 0 : i32
    %c0_i32_0 = arith.constant 0 : i32
    return %arg0, %c0_i32 : i32, i32
  }
  func.func @transform_1(%arg0: i32) -> (i32, i32) {
    %c0_i32 = arith.constant 0 : i32
    %c0_i32_0 = arith.constant 0 : i32
    %c0_i32_1 = arith.constant 0 : i32
    return %c0_i32, %c0_i32_0 : i32, i32
  }
  func.func @transform_2(%arg0: i32) -> (i32, i32) {
    %c0_i32 = arith.constant 0 : i32
    %c0_i32_0 = arith.constant 0 : i32
    return %arg0, %c0_i32 : i32, i32
  }
}

</mosaic_0001>

<llo_original>
// kernel: tpu_custom_call.1
$region0: #{tpu_custom_call.1}
  #allocation0 [shape = 'u32[]', space=smem, size = 0x4, offset = 0x4, fixed_abs, tag = 'smem constant byte address 0x4 - core index']
  #allocation1 [shape = 'u32[144,128]{1,0:T(1,128)}', space=vmem, size = 0x12000, scoped, tag = 'internal scratch']
  %s0 = inlined_call_operand.vmem [shape: s32[16,1], index: 0, kind: input, shape index: {}]
  %s1 = inlined_call_operand.hbm [shape: f32[128,128], index: 1, kind: input, shape index: {}]
  %s2 = inlined_call_operand.hbm [shape: f32[16,128], index: 2, kind: output, shape index: {}]
  %s3 = sld [smem:[#allocation0]]
  $region22: #{tpu_custom_call.1} parent=0
    _
  %s5 = ssub.s32 1, %s3
  %s6 = scalar_select 0, %s5, %s3
  $region1: #{tpu_custom_call.1} parent=0
    #allocation2 [shape = 'u8[65536]{0}', space=vmem, size = 0x10000, scoped, tag = 'input window, operand 1, single buffered']
    #allocation3 [shape = 's32[1]{0}', space=sflag, size = 0x4, scoped, tag = 'scoped memory for tpu_custom_call.1']
    #allocation4 [shape = 's32[1]{0}', space=sflag, size = 0x4, scoped, tag = 'scoped memory for tpu_custom_call.1']
    #allocation5 [shape = 'u8[8192]{0}', space=vmem, size = 0x2000, scoped, tag = 'output window, operand 0, single buffered']
    %7 = vsyncpa [#allocation3], 0
    %8 = vsyncpa [#allocation4], 0
    // Predicated region
    $region2: #{tpu_custom_call.1} parent=1 // pred_check
      _
    $region3: #{tpu_custom_call.1} parent=1 // pred_check_branch
      %10 = sbr.rel (0) target = $region5
    $region4: #{tpu_custom_call.1} parent=1 // pred_region
      _
    $region5: #{tpu_custom_call.1} parent=1 // pred_fallthru
      _
    // Predicated region
    $region6: #{tpu_custom_call.1} parent=1 // pred_check
      _
    $region7: #{tpu_custom_call.1} parent=1 // pred_check_branch
      %12 = sbr.rel (0) target = $region9
    $region8: #{tpu_custom_call.1} parent=1 // pred_region
      %s14 = ssub.s32 2048, 2048
      %15 = vsyncadd [#allocation3], %s14
      %s16 = sshll.u32 [#allocation2], 4
      %s17 = int_to_ptr.vmem [resolvable:$true] %s16
      %22 = dma.hbm_to_vmem [thread:$0]  %s1, 2048, %s17, [#allocation3], 128, 128, 8
    $region9: #{tpu_custom_call.1} parent=1 // pred_fallthru
      _
    // Predicated region
    $region10: #{tpu_custom_call.1} parent=1 // pred_check
      _
    $region11: #{tpu_custom_call.1} parent=1 // pred_check_branch
      %24 = sbr.rel (0) target = $region13
    $region12: #{tpu_custom_call.1} parent=1 // pred_region
      %25 = dma.done [#allocation3], 2048
    $region13: #{tpu_custom_call.1} parent=1 // pred_fallthru
      _
    %v26 = vld [vmem:[#allocation2] sm:$0xff]
    %v27 = vld [vmem:[#allocation2 + $0x8] sm:$0xff]
    %v28 = vld [vmem:[#allocation2 + $0x10] sm:$0xff]
    %v29 = vld [vmem:[#allocation2 + $0x18] sm:$0xff]
    %v30 = vld [vmem:[#allocation2 + $0x20] sm:$0xff]
    %v31 = vld [vmem:[#allocation2 + $0x28] sm:$0xff]
    %v32 = vld [vmem:[#allocation2 + $0x30] sm:$0xff]
    %v33 = vld [vmem:[#allocation2 + $0x38] sm:$0xff]
    %v34 = vld [vmem:[#allocation2 + $0x40] sm:$0xff]
    %v35 = vld [vmem:[#allocation2 + $0x48] sm:$0xff]
    %v36 = vld [vmem:[#allocation2 + $0x50] sm:$0xff]
    %v37 = vld [vmem:[#allocation2 + $0x58] sm:$0xff]
    %v38 = vld [vmem:[#allocation2 + $0x60] sm:$0xff]
    %v39 = vld [vmem:[#allocation2 + $0x68] sm:$0xff]
    %v40 = vld [vmem:[#allocation2 + $0x70] sm:$0xff]
    %v41 = vld [vmem:[#allocation2 + $0x78] sm:$0xff]
    %v42 = vld [vmem:[%s0] sm:$0xff]
    %v43 = vld [vmem:[%s0 + $0x8] sm:$0xff]
    %v44 = vlaneseq
    %v45 = vand.u32 %v44, 127
    %46 = vset.pattern.permute.xlu0 0
    %47 = vperm.xlu0 %46, %v42
    %v48 = vpop.permute.xlu0 %47
    %49 = vset.pattern.permute.xlu0 0
    %50 = vperm.xlu0 %49, %v43
    %v51 = vpop.permute.xlu0 %50
    %vm52 = vcmp.eq.s32.totalorder %v45, %v48
    %vm53 = vcmp.eq.s32.totalorder %v45, %v51
    %v54 = vsel %vm52, 11.313708, 0.0
    %v55 = vsel %vm53, 11.313708, 0.0
    %56 = vmatprep.subr.mxu0 0.0
    %57 = vmatpush1.msra.mxu0 %v41
    %58 = vmatprep.subr.mxu0 0.0
    %59 = vmatpush1.msra.mxu0 %v40
    %60 = vmatprep.subr.mxu0 0.0
    %61 = vmatpush1.msra.mxu0 %v39
    %62 = vmatprep.subr.mxu0 0.0
    %63 = vmatpush1.msra.mxu0 %v38
    %64 = vmatprep.subr.mxu0 0.0
    %65 = vmatpush1.msra.mxu0 %v37
    %66 = vmatprep.subr.mxu0 0.0
    %67 = vmatpush1.msra.mxu0 %v36
    %68 = vmatprep.subr.mxu0 0.0
    %69 = vmatpush1.msra.mxu0 %v35
    %70 = vmatprep.subr.mxu0 0.0
    %71 = vmatpush1.msra.mxu0 %v34
    %72 = vmatprep.subr.mxu0 0.0
    %73 = vmatpush1.msra.mxu0 %v33
    %74 = vmatprep.subr.mxu0 0.0
    %75 = vmatpush1.msra.mxu0 %v32
    %76 = vmatprep.subr.mxu0 0.0
    %77 = vmatpush1.msra.mxu0 %v31
    %78 = vmatprep.subr.mxu0 0.0
    %79 = vmatpush1.msra.mxu0 %v30
    %80 = vmatprep.subr.mxu0 0.0
    %81 = vmatpush1.msra.mxu0 %v29
    %82 = vmatprep.subr.mxu0 0.0
    %83 = vmatpush1.msra.mxu0 %v28
    %84 = vmatprep.subr.mxu0 0.0
    %85 = vmatpush1.msra.mxu0 %v27
    %86 = vmatprep.subr.mxu0 0.0
    %87 = vmatpush1.msra.mxu0 %v26
    %88 = vmatprep.subr.mxu0 0.0
    %89 = vmatpush2.msra.mxu0 0.0
    %90 = vmatprep.subr.mxu0 0.0
    %91 = vmatpush2.msra.mxu0 0.0
    %92 = vmatprep.subr.mxu0 0.0
    %93 = vmatpush2.msra.mxu0 0.0
    %94 = vmatprep.subr.mxu0 0.0
    %95 = vmatpush2.msra.mxu0 0.0
    %96 = vmatprep.subr.mxu0 0.0
    %97 = vmatpush2.msra.mxu0 0.0
    %98 = vmatprep.subr.mxu0 0.0
    %99 = vmatpush2.msra.mxu0 0.0
    %100 = vmatprep.subr.mxu0 0.0
    %101 = vmatpush2.msra.mxu0 0.0
    %102 = vmatprep.subr.mxu0 0.0
    %103 = vmatpush2.msra.mxu0 0.0
    %104 = vmatprep.subr.mxu0 0.0
    %105 = vmatpush2.msra.mxu0 0.0
    %106 = vmatprep.subr.mxu0 0.0
    %107 = vmatpush2.msra.mxu0 0.0
    %108 = vmatprep.subr.mxu0 0.0
    %109 = vmatpush2.msra.mxu0 0.0
    %110 = vmatprep.subr.mxu0 0.0
    %111 = vmatpush2.msra.mxu0 0.0
    %112 = vmatprep.subr.mxu0 0.0
    %113 = vmatpush2.msra.mxu0 0.0
    %114 = vmatprep.subr.mxu0 0.0
    %115 = vmatpush2.msra.mxu0 0.0
    %116 = vmatprep.subr.mxu0 0.0
    %117 = vmatpush2.msra.mxu0 0.0
    %118 = vmatprep.subr.mxu0 0.0
    %119 = vmatpush2.msra.mxu0 0.0
    %120 = vmatprep.mubr.f32.mxu0 0.0
    %121 = vmatmul.mubr.f32.gmra.mxu0 %v54
    %v122 = vpop.f32.mrf.mxu0
    %v123 = vadd.f32 0.0, %v122
    %v124 = vpop.f32.mrf.mxu0
    %125 = vmatprep.mubr.f32.mxu0 0.0
    %126 = vmatmul.mubr.f32.gmra.mxu0 %v55
    %v127 = vpop.f32.mrf.mxu0
    %v128 = vadd.f32 0.0, %v127
    %v129 = vpop.f32.mrf.mxu0
    %130 = vdwg.mxu0
    %131 = vst [vmem:[#allocation5] sm:$0xff] %v123
    %132 = vst [vmem:[#allocation5 + $0x8] sm:$0xff] %v128
    // Predicated region
    $region14: #{tpu_custom_call.1} parent=1 // pred_check
      _
    $region15: #{tpu_custom_call.1} parent=1 // pred_check_branch
      %134 = sbr.rel (0) target = $region17
    $region16: #{tpu_custom_call.1} parent=1 // pred_region
      %s136 = ssub.s32 256, 256
      %137 = vsyncadd [#allocation4], %s136
      %s138 = sshll.u32 [#allocation5], 4
      %s139 = int_to_ptr.vmem [resolvable:$true] %s138
      %144 = dma.vmem_to_hbm [thread:$0]  %s139, 256, %s2, [#allocation4], 128, 128, 8
    $region17: #{tpu_custom_call.1} parent=1 // pred_fallthru
      _
    // Predicated region
    $region18: #{tpu_custom_call.1} parent=1 // pred_check
      _
    $region19: #{tpu_custom_call.1} parent=1 // pred_check_branch
      %146 = sbr.rel (0) target = $region21
    $region20: #{tpu_custom_call.1} parent=1 // pred_region
      %147 = dma.done [#allocation4], 256
    $region21: #{tpu_custom_call.1} parent=1 // pred_fallthru
      _
    %148 = vsyncpa [#allocation3], 1
    %149 = vsyncpa [#allocation4], 1

</llo_original>
